<compile_context>
chip_gen: v5e
topology: v5e:2x2
jax: 0.10.0
libtpu: 0.0.40
codegen_flags: <defaults>
</compile_context>

<pallas_src>
import functools

import numpy as np
import jax
import jax.numpy as jnp
from jax.experimental import pallas as pl
from jax.experimental.pallas import tpu as pltpu


def _round_up(x, m):
    return ((x + m - 1) // m) * m


def _pick_batch_tile(B, L):
    """Largest batch tile BT s.t. BT divides B, BT*L <= ~128 rows, BT*L % 8 == 0."""
    max_bt = max(1, 128 // max(L, 1))
    for bt in range(min(B, max_bt), 0, -1):
        if B % bt == 0 and (bt * L) % 8 == 0:
            return bt
    return B  # single full-extent tile is always a legal block


def _decoder_kernel(s_real, ids_ref, enc_ref, emb_ref, wout_ref, bias_ref,
                    out_ref, attn_ref, embx_ref):
    # ids_ref : SMEM (B*L,) int32       (scalar prefetch)
    # enc_ref : (BT, S_pad, H)  bf16    encoder outputs for this batch tile
    # emb_ref : (V_pad, H)      f32     embedding table (padded rows are zero)
    # wout_ref: (H, V_pad)      bf16    output projection (padded cols zero)
    # bias_ref: (1, V_pad)      f32     output bias (padded cols = -1e30)
    # out_ref : (M, V_pad)      f32     per-step log-probs, M = BT*L
    # attn_ref: (M, S_pad)      f32     per-step attention weights
    # embx_ref: (M, H)          f32     scratch for gathered embeddings
    M, _ = out_ref.shape
    BT, S_pad, H = enc_ref.shape
    L = M // BT
    V_pad = emb_ref.shape[0]
    row0 = pl.program_id(0) * M

    # --- embedding lookup: scalar-prefetched ids drive a row gather ----------
    # TODO(synk): at very large vocab, stream V in 128-lane tiles with an
    # online log-sum-exp instead of keeping the full (V_pad, H) table resident.
    def gather(m, carry):
        tok = ids_ref[row0 + m]
        tok = jnp.minimum(jnp.maximum(tok, 0), V_pad - 1)   # bounds-safe gather
        embx_ref[pl.ds(m, 1), :] = emb_ref[pl.ds(tok, 1), :]
        return carry
    jax.lax.fori_loop(0, M, gather, 0, unroll=(M <= 64))

    # TODO(synk): nn.Dropout is declared in __init__ but never applied in the
    # reference forward(), so it is intentionally omitted here.

    q = embx_ref[...].reshape(BT, L, H).astype(jnp.bfloat16)   # (BT, L, H)
    enc = enc_ref[...]                                         # (BT, S_pad, H) bf16

    # --- dot-product attention over encoder outputs (per batch) --------------
    scores = jnp.einsum('bld,bsd->bls', q, enc,
                        preferred_element_type=jnp.float32)    # (BT, L, S_pad) f32
    if S_pad != s_real:  # mask padded source positions (static branch)
        s_iota = jax.lax.broadcasted_iota(jnp.int32, scores.shape, 2)
        scores = jnp.where(s_iota < s_real, scores, -1e30)
    m_ = jnp.max(scores, axis=-1, keepdims=True)
    e = jnp.exp(scores - m_)
    attn = e * pl.reciprocal(jnp.sum(e, axis=-1, keepdims=True), approx=True)
    attn_ref[...] = attn.reshape(M, S_pad)

    # --- context + vocab projection (bf16 MXU inputs, f32 accumulation) ------
    ctx = jnp.einsum('bls,bsd->bld', attn.astype(jnp.bfloat16), enc,
                     preferred_element_type=jnp.float32)       # (BT, L, H) f32
    bias = bias_ref[...]                                       # (1, V_pad) f32, loaded once
    logits = jnp.dot(ctx.reshape(M, H).astype(jnp.bfloat16), wout_ref[...],
                     preferred_element_type=jnp.float32) + bias

    # --- log-softmax in f32 (padded vocab cols carry -1e30 bias -> exp == 0) -
    lmax = jnp.max(logits, axis=-1, keepdims=True)
    shifted = logits - lmax
    lse = jnp.log(jnp.sum(jnp.exp(shifted), axis=-1, keepdims=True))
    out_ref[...] = shifted - lse


def decoder_forward_all_steps(x_ids, encoder_outputs, emb_w, w_out, b_out):
    """Runs all L teacher-forced decoder steps in one Pallas kernel.

    x_ids:            (B, L) int32
    encoder_outputs:  (B, S, H) float32
    Returns (outputs, attn) with shapes (B, L, V) and (B, L, S).
    """
    B, L = x_ids.shape
    Benc, S, H = encoder_outputs.shape
    assert Benc == B
    V = emb_w.shape[0]

    S_pad = _round_up(S, 128)
    V_pad = _round_up(V, 128)
    BT = _pick_batch_tile(B, L)          # batch tile -> M = BT*L rows per grid step
    n_tiles = B // BT
    M = BT * L

    f32, bf16 = jnp.float32, jnp.bfloat16
    ids_flat = x_ids.reshape(B * L).astype(jnp.int32)
    # Grid-invariant parameters, padded so output blocks are lane-dense.
    emb_pad = jnp.zeros((V_pad, H), f32).at[:V, :].set(emb_w.astype(f32))
    wout_pad = jnp.zeros((H, V_pad), bf16).at[:, :V].set(w_out.astype(bf16))
    bias_pad = jnp.full((1, V_pad), -1e30, f32).at[0, :V].set(b_out.astype(f32))
    enc_pad = jnp.zeros((B, S_pad, H), bf16).at[:, :S, :].set(
        encoder_outputs.astype(bf16))

    grid_spec = pltpu.PrefetchScalarGridSpec(
        num_scalar_prefetch=1,          # token ids -> SMEM
        grid=(n_tiles,),
        in_specs=[
            pl.BlockSpec((BT, S_pad, H), lambda t, ids: (t, 0, 0)),  # enc
            pl.BlockSpec((V_pad, H), lambda t, ids: (0, 0)),         # embedding
            pl.BlockSpec((H, V_pad), lambda t, ids: (0, 0)),         # w_out
            pl.BlockSpec((1, V_pad), lambda t, ids: (0, 0)),         # bias
        ],
        out_specs=(
            pl.BlockSpec((M, V_pad), lambda t, ids: (t, 0)),         # log-probs
            pl.BlockSpec((M, S_pad), lambda t, ids: (t, 0)),         # attention
        ),
        scratch_shapes=[pltpu.VMEM((M, H), jnp.float32)],
    )
    out_shape = (
        jax.ShapeDtypeStruct((B * L, V_pad), jnp.float32),
        jax.ShapeDtypeStruct((B * L, S_pad), jnp.float32),
    )

    # Explicit VMEM budget from the tile footprint (double-buffered I/O blocks
    # + scratch), with headroom for compiler temporaries.
    tile_bytes = (BT * S_pad * H * 2 + V_pad * H * 4 + H * V_pad * 2 + V_pad * 4
                  + M * V_pad * 4 + M * S_pad * 4)
    vmem_limit = int(min(max(4 * (2 * tile_bytes + M * H * 4), 8 << 20), 64 << 20))

    out_flat, attn_flat = pl.pallas_call(
        functools.partial(_decoder_kernel, S),
        out_shape=out_shape,
        grid_spec=grid_spec,
        compiler_params=pltpu.CompilerParams(
            dimension_semantics=("parallel",),   # batch-tile axis -> megacore
            vmem_limit_bytes=vmem_limit),
    )(ids_flat, enc_pad, emb_pad, wout_pad, bias_pad)

    outputs = out_flat.reshape(B, L, V_pad)[:, :, :V]
    attn = attn_flat.reshape(B, L, S_pad)[:, :, :S]
    return outputs, attn


@jax.jit
def _decoder_device_forward(x_ids, encoder_outputs, emb_w, w_out, b_out):
    outputs, attn = decoder_forward_all_steps(
        x_ids, encoder_outputs, emb_w, w_out, b_out)
    symbols = jnp.argmax(outputs, axis=-1).astype(jnp.int32)   # one fused argmax
    return outputs, attn, symbols


def decoder_forward(x_ids, encoder_outputs, emb_w, w_out, b_out, length, eos_id):
    """Mirrors Decoder.forward() in teacher-forcing mode.

    Returns (decoder_outputs, decoder_hidden, ret_dict):
      decoder_outputs: list of (B, V) log-prob arrays, one per step
      decoder_hidden:  None (encoder_hidden=None -> _init_state returns None)
      ret_dict: {'attention_score': [(B,1,S)...], 'sequence': [(B,1)...],
                 'length': [int...]}
    """
    B, L = x_ids.shape
    assert L == length

    outputs, attn, symbols = _decoder_device_forward(
        x_ids, encoder_outputs, emb_w, w_out, b_out)
    symbols_np = np.asarray(symbols)          # single device->host transfer

    ret_dict = {'attention_score': [], 'sequence': [], 'length': None}
    decoder_outputs = []
    sequence_symbols = []
    lengths = np.array([length] * B)

    for di in range(length):
        decoder_outputs.append(outputs[:, di, :])                 # (B, V)
        ret_dict['attention_score'].append(attn[:, di:di + 1, :])  # (B, 1, S)
        sequence_symbols.append(symbols[:, di:di + 1])             # topk(1)[1]
        eos_batches = symbols_np[:, di] == eos_id
        update_idx = ((lengths > di) & eos_batches) != 0
        lengths[update_idx] = len(sequence_symbols)

    ret_dict['sequence'] = sequence_symbols
    ret_dict['length'] = lengths.tolist()
    decoder_hidden = None   # encoder_hidden is None -> _init_state -> None
    return decoder_outputs, decoder_hidden, ret_dict


def _reference_forward(x_ids, enc, emb_w, w_out, b_out):
    """Pure-JAX f32 reference of the same forward pass (for a sanity check)."""
    emb = emb_w[x_ids]                                   # (B, L, H)
    scores = jnp.einsum('blh,bsh->bls', emb, enc)        # (B, L, S)
    attn = jax.nn.softmax(scores, axis=-1)
    ctx = jnp.einsum('bls,bsh->blh', attn, enc)
    logits = ctx @ w_out + b_out
    return jax.nn.log_softmax(logits, axis=-1), attn


if __name__ == "__main__":
    # Small deterministic config.
    B, L, S, H, V = 2, 8, 8, 32, 16       # length=8, hidden=32, vocab=16
    eos_id = V - 1

    key = jax.random.PRNGKey(0)
    k1, k2, k3, k4, k5 = jax.random.split(key, 5)

    emb_w = jax.random.normal(k1, (V, H), dtype=jnp.float32) * 0.1
    w_out = jax.random.normal(k2, (H, V), dtype=jnp.float32) * 0.1
    b_out = jax.random.normal(k3, (V,), dtype=jnp.float32) * 0.01

    x_ids = jax.random.randint(k4, (B, L), 0, V, dtype=jnp.int32)
    encoder_outputs = jax.random.normal(k5, (B, S, H), dtype=jnp.float32)

    decoder_outputs, decoder_hidden, ret_dict = decoder_forward(
        x_ids, encoder_outputs, emb_w, w_out, b_out, length=L, eos_id=eos_id)

    # Shapes implied by the PyTorch forward().
    assert len(decoder_outputs) == L
    assert decoder_outputs[0].shape == (B, V)
    assert len(ret_dict['attention_score']) == L
    assert ret_dict['attention_score'][0].shape == (B, 1, S)
    assert len(ret_dict['sequence']) == L
    assert ret_dict['sequence'][0].shape == (B, 1)
    assert len(ret_dict['length']) == B
    assert decoder_hidden is None

    # Numeric sanity vs. pure-JAX f32 reference (generous tol: bf16 MXU inputs).
    ref_out, ref_attn = _reference_forward(x_ids, encoder_outputs, emb_w, w_out, b_out)
    out_all = jnp.stack(decoder_outputs, axis=1)                       # (B, L, V)
    attn_all = jnp.concatenate(ret_dict['attention_score'], axis=1)    # (B, L, S)
    assert np.allclose(np.asarray(out_all), np.asarray(ref_out), atol=0.15, rtol=0.0)
    assert np.allclose(np.asarray(attn_all), np.asarray(ref_attn), atol=0.05, rtol=0.0)

    jax.block_until_ready(out_all)
    print("KERNEL_OK")
</pallas_src>

<mosaic_0001>
module attributes {stable_mosaic.version = 11 : i64} {
  func.func @_decoder_kernel(%arg0: i32, %arg1: memref<16xi32, #tpu.memory_space<smem>>, %arg2: memref<2x128x32xbf16, #tpu.memory_space<vmem>>, %arg3: memref<128x32xf32, #tpu.memory_space<vmem>>, %arg4: memref<32x128xbf16, #tpu.memory_space<vmem>>, %arg5: memref<1x128xf32, #tpu.memory_space<vmem>>, %arg6: memref<16x128xf32, #tpu.memory_space<vmem>>, %arg7: memref<16x128xf32, #tpu.memory_space<vmem>>, %arg8: memref<16x32xf32, #tpu.memory_space<vmem>>) attributes {dimension_semantics = [#tpu.dimension_semantics<parallel>], iteration_bounds = array<i64: 1>, scalar_prefetch = 1 : i64, scratch_operands = 1 : i64, tpu.core_type = #tpu.core_type<tc>, window_params = [{transform_indices = @transform_0, window_bounds = array<i64: 2, 128, 32>}, {pipeline_mode = #tpu.pipeline_mode<synchronous>, transform_indices = @transform_1, window_bounds = array<i64: 128, 32>}, {pipeline_mode = #tpu.pipeline_mode<synchronous>, transform_indices = @transform_2, window_bounds = array<i64: 32, 128>}, {pipeline_mode = #tpu.pipeline_mode<synchronous>, transform_indices = @transform_3, window_bounds = array<i64: 1, 128>}, {transform_indices = @transform_4, window_bounds = array<i64: 16, 128>}, {transform_indices = @transform_5, window_bounds = array<i64: 16, 128>}]} {
    %c16_i32 = arith.constant 16 : i32
    %0 = arith.muli %arg0, %c16_i32 : i32
    %c0_i32 = arith.constant 0 : i32
    %1 = arith.addi %0, %c0_i32 : i32
    %2 = arith.index_cast %1 : i32 to index
    %3 = memref.load %arg1[%2] : memref<16xi32, #tpu.memory_space<smem>>
    %c0_i32_0 = arith.constant 0 : i32
    %4 = arith.maxsi %3, %c0_i32_0 : i32
    %c127_i32 = arith.constant 127 : i32
    %5 = arith.minsi %4, %c127_i32 : i32
    %6 = arith.index_cast %5 : i32 to index
    %c0 = arith.constant 0 : index
    %7 = vector.load %arg3[%6, %c0] : memref<128x32xf32, #tpu.memory_space<vmem>>, vector<1x32xf32>
    %8 = arith.index_cast %c0_i32 : i32 to index
    %c0_1 = arith.constant 0 : index
    %9 = vector.load %arg8[%8, %c0_1] : memref<16x32xf32, #tpu.memory_space<vmem>>, vector<1x32xf32>
    tpu.vector_store %arg8[%8, %c0_1], %7 {strides = array<i32>} : memref<16x32xf32, #tpu.memory_space<vmem>>, vector<1x32xf32>,
    %c1_i32 = arith.constant 1 : i32
    %10 = arith.addi %0, %c1_i32 : i32
    %11 = arith.index_cast %10 : i32 to index
    %12 = memref.load %arg1[%11] : memref<16xi32, #tpu.memory_space<smem>>
    %c0_i32_2 = arith.constant 0 : i32
    %13 = arith.maxsi %12, %c0_i32_2 : i32
    %c127_i32_3 = arith.constant 127 : i32
    %14 = arith.minsi %13, %c127_i32_3 : i32
    %15 = arith.index_cast %14 : i32 to index
    %c0_4 = arith.constant 0 : index
    %16 = vector.load %arg3[%15, %c0_4] : memref<128x32xf32, #tpu.memory_space<vmem>>, vector<1x32xf32>
    %17 = arith.index_cast %c1_i32 : i32 to index
    %c0_5 = arith.constant 0 : index
    %18 = vector.load %arg8[%17, %c0_5] : memref<16x32xf32, #tpu.memory_space<vmem>>, vector<1x32xf32>
    tpu.vector_store %arg8[%17, %c0_5], %16 {strides = array<i32>} : memref<16x32xf32, #tpu.memory_space<vmem>>, vector<1x32xf32>,
    %c2_i32 = arith.constant 2 : i32
    %19 = arith.addi %0, %c2_i32 : i32
    %20 = arith.index_cast %19 : i32 to index
    %21 = memref.load %arg1[%20] : memref<16xi32, #tpu.memory_space<smem>>
    %c0_i32_6 = arith.constant 0 : i32
    %22 = arith.maxsi %21, %c0_i32_6 : i32
    %c127_i32_7 = arith.constant 127 : i32
    %23 = arith.minsi %22, %c127_i32_7 : i32
    %24 = arith.index_cast %23 : i32 to index
    %c0_8 = arith.constant 0 : index
    %25 = vector.load %arg3[%24, %c0_8] : memref<128x32xf32, #tpu.memory_space<vmem>>, vector<1x32xf32>
    %26 = arith.index_cast %c2_i32 : i32 to index
    %c0_9 = arith.constant 0 : index
    %27 = vector.load %arg8[%26, %c0_9] : memref<16x32xf32, #tpu.memory_space<vmem>>, vector<1x32xf32>
    tpu.vector_store %arg8[%26, %c0_9], %25 {strides = array<i32>} : memref<16x32xf32, #tpu.memory_space<vmem>>, vector<1x32xf32>,
    %c3_i32 = arith.constant 3 : i32
    %28 = arith.addi %0, %c3_i32 : i32
    %29 = arith.index_cast %28 : i32 to index
    %30 = memref.load %arg1[%29] : memref<16xi32, #tpu.memory_space<smem>>
    %c0_i32_10 = arith.constant 0 : i32
    %31 = arith.maxsi %30, %c0_i32_10 : i32
    %c127_i32_11 = arith.constant 127 : i32
    %32 = arith.minsi %31, %c127_i32_11 : i32
    %33 = arith.index_cast %32 : i32 to index
    %c0_12 = arith.constant 0 : index
    %34 = vector.load %arg3[%33, %c0_12] : memref<128x32xf32, #tpu.memory_space<vmem>>, vector<1x32xf32>
    %35 = arith.index_cast %c3_i32 : i32 to index
    %c0_13 = arith.constant 0 : index
    %36 = vector.load %arg8[%35, %c0_13] : memref<16x32xf32, #tpu.memory_space<vmem>>, vector<1x32xf32>
    tpu.vector_store %arg8[%35, %c0_13], %34 {strides = array<i32>} : memref<16x32xf32, #tpu.memory_space<vmem>>, vector<1x32xf32>,
    %c4_i32 = arith.constant 4 : i32
    %37 = arith.addi %0, %c4_i32 : i32
    %38 = arith.index_cast %37 : i32 to index
    %39 = memref.load %arg1[%38] : memref<16xi32, #tpu.memory_space<smem>>
    %c0_i32_14 = arith.constant 0 : i32
    %40 = arith.maxsi %39, %c0_i32_14 : i32
    %c127_i32_15 = arith.constant 127 : i32
    %41 = arith.minsi %40, %c127_i32_15 : i32
    %42 = arith.index_cast %41 : i32 to index
    %c0_16 = arith.constant 0 : index
    %43 = vector.load %arg3[%42, %c0_16] : memref<128x32xf32, #tpu.memory_space<vmem>>, vector<1x32xf32>
    %44 = arith.index_cast %c4_i32 : i32 to index
    %c0_17 = arith.constant 0 : index
    %45 = vector.load %arg8[%44, %c0_17] : memref<16x32xf32, #tpu.memory_space<vmem>>, vector<1x32xf32>
    tpu.vector_store %arg8[%44, %c0_17], %43 {strides = array<i32>} : memref<16x32xf32, #tpu.memory_space<vmem>>, vector<1x32xf32>,
    %c5_i32 = arith.constant 5 : i32
    %46 = arith.addi %0, %c5_i32 : i32
    %47 = arith.index_cast %46 : i32 to index
    %48 = memref.load %arg1[%47] : memref<16xi32, #tpu.memory_space<smem>>
    %c0_i32_18 = arith.constant 0 : i32
    %49 = arith.maxsi %48, %c0_i32_18 : i32
    %c127_i32_19 = arith.constant 127 : i32
    %50 = arith.minsi %49, %c127_i32_19 : i32
    %51 = arith.index_cast %50 : i32 to index
    %c0_20 = arith.constant 0 : index
    %52 = vector.load %arg3[%51, %c0_20] : memref<128x32xf32, #tpu.memory_space<vmem>>, vector<1x32xf32>
    %53 = arith.index_cast %c5_i32 : i32 to index
    %c0_21 = arith.constant 0 : index
    %54 = vector.load %arg8[%53, %c0_21] : memref<16x32xf32, #tpu.memory_space<vmem>>, vector<1x32xf32>
    tpu.vector_store %arg8[%53, %c0_21], %52 {strides = array<i32>} : memref<16x32xf32, #tpu.memory_space<vmem>>, vector<1x32xf32>,
    %c6_i32 = arith.constant 6 : i32
    %55 = arith.addi %0, %c6_i32 : i32
    %56 = arith.index_cast %55 : i32 to index
    %57 = memref.load %arg1[%56] : memref<16xi32, #tpu.memory_space<smem>>
    %c0_i32_22 = arith.constant 0 : i32
    %58 = arith.maxsi %57, %c0_i32_22 : i32
    %c127_i32_23 = arith.constant 127 : i32
    %59 = arith.minsi %58, %c127_i32_23 : i32
    %60 = arith.index_cast %59 : i32 to index
    %c0_24 = arith.constant 0 : index
    %61 = vector.load %arg3[%60, %c0_24] : memref<128x32xf32, #tpu.memory_space<vmem>>, vector<1x32xf32>
    %62 = arith.index_cast %c6_i32 : i32 to index
    %c0_25 = arith.constant 0 : index
    %63 = vector.load %arg8[%62, %c0_25] : memref<16x32xf32, #tpu.memory_space<vmem>>, vector<1x32xf32>
    tpu.vector_store %arg8[%62, %c0_25], %61 {strides = array<i32>} : memref<16x32xf32, #tpu.memory_space<vmem>>, vector<1x32xf32>,
    %c7_i32 = arith.constant 7 : i32
    %64 = arith.addi %0, %c7_i32 : i32
    %65 = arith.index_cast %64 : i32 to index
    %66 = memref.load %arg1[%65] : memref<16xi32, #tpu.memory_space<smem>>
    %c0_i32_26 = arith.constant 0 : i32
    %67 = arith.maxsi %66, %c0_i32_26 : i32
    %c127_i32_27 = arith.constant 127 : i32
    %68 = arith.minsi %67, %c127_i32_27 : i32
    %69 = arith.index_cast %68 : i32 to index
    %c0_28 = arith.constant 0 : index
    %70 = vector.load %arg3[%69, %c0_28] : memref<128x32xf32, #tpu.memory_space<vmem>>, vector<1x32xf32>
    %71 = arith.index_cast %c7_i32 : i32 to index
    %c0_29 = arith.constant 0 : index
    %72 = vector.load %arg8[%71, %c0_29] : memref<16x32xf32, #tpu.memory_space<vmem>>, vector<1x32xf32>
    tpu.vector_store %arg8[%71, %c0_29], %70 {strides = array<i32>} : memref<16x32xf32, #tpu.memory_space<vmem>>, vector<1x32xf32>,
    %c8_i32 = arith.constant 8 : i32
    %73 = arith.addi %0, %c8_i32 : i32
    %74 = arith.index_cast %73 : i32 to index
    %75 = memref.load %arg1[%74] : memref<16xi32, #tpu.memory_space<smem>>
    %c0_i32_30 = arith.constant 0 : i32
    %76 = arith.maxsi %75, %c0_i32_30 : i32
    %c127_i32_31 = arith.constant 127 : i32
    %77 = arith.minsi %76, %c127_i32_31 : i32
    %78 = arith.index_cast %77 : i32 to index
    %c0_32 = arith.constant 0 : index
    %79 = vector.load %arg3[%78, %c0_32] : memref<128x32xf32, #tpu.memory_space<vmem>>, vector<1x32xf32>
    %80 = arith.index_cast %c8_i32 : i32 to index
    %c0_33 = arith.constant 0 : index
    %81 = vector.load %arg8[%80, %c0_33] : memref<16x32xf32, #tpu.memory_space<vmem>>, vector<1x32xf32>
    tpu.vector_store %arg8[%80, %c0_33], %79 {strides = array<i32>} : memref<16x32xf32, #tpu.memory_space<vmem>>, vector<1x32xf32>,
    %c9_i32 = arith.constant 9 : i32
    %82 = arith.addi %0, %c9_i32 : i32
    %83 = arith.index_cast %82 : i32 to index
    %84 = memref.load %arg1[%83] : memref<16xi32, #tpu.memory_space<smem>>
    %c0_i32_34 = arith.constant 0 : i32
    %85 = arith.maxsi %84, %c0_i32_34 : i32
    %c127_i32_35 = arith.constant 127 : i32
    %86 = arith.minsi %85, %c127_i32_35 : i32
    %87 = arith.index_cast %86 : i32 to index
    %c0_36 = arith.constant 0 : index
    %88 = vector.load %arg3[%87, %c0_36] : memref<128x32xf32, #tpu.memory_space<vmem>>, vector<1x32xf32>
    %89 = arith.index_cast %c9_i32 : i32 to index
    %c0_37 = arith.constant 0 : index
    %90 = vector.load %arg8[%89, %c0_37] : memref<16x32xf32, #tpu.memory_space<vmem>>, vector<1x32xf32>
    tpu.vector_store %arg8[%89, %c0_37], %88 {strides = array<i32>} : memref<16x32xf32, #tpu.memory_space<vmem>>, vector<1x32xf32>,
    %c10_i32 = arith.constant 10 : i32
    %91 = arith.addi %0, %c10_i32 : i32
    %92 = arith.index_cast %91 : i32 to index
    %93 = memref.load %arg1[%92] : memref<16xi32, #tpu.memory_space<smem>>
    %c0_i32_38 = arith.constant 0 : i32
    %94 = arith.maxsi %93, %c0_i32_38 : i32
    %c127_i32_39 = arith.constant 127 : i32
    %95 = arith.minsi %94, %c127_i32_39 : i32
    %96 = arith.index_cast %95 : i32 to index
    %c0_40 = arith.constant 0 : index
    %97 = vector.load %arg3[%96, %c0_40] : memref<128x32xf32, #tpu.memory_space<vmem>>, vector<1x32xf32>
    %98 = arith.index_cast %c10_i32 : i32 to index
    %c0_41 = arith.constant 0 : index
    %99 = vector.load %arg8[%98, %c0_41] : memref<16x32xf32, #tpu.memory_space<vmem>>, vector<1x32xf32>
    tpu.vector_store %arg8[%98, %c0_41], %97 {strides = array<i32>} : memref<16x32xf32, #tpu.memory_space<vmem>>, vector<1x32xf32>,
    %c11_i32 = arith.constant 11 : i32
    %100 = arith.addi %0, %c11_i32 : i32
    %101 = arith.index_cast %100 : i32 to index
    %102 = memref.load %arg1[%101] : memref<16xi32, #tpu.memory_space<smem>>
    %c0_i32_42 = arith.constant 0 : i32
    %103 = arith.maxsi %102, %c0_i32_42 : i32
    %c127_i32_43 = arith.constant 127 : i32
    %104 = arith.minsi %103, %c127_i32_43 : i32
    %105 = arith.index_cast %104 : i32 to index
    %c0_44 = arith.constant 0 : index
    %106 = vector.load %arg3[%105, %c0_44] : memref<128x32xf32, #tpu.memory_space<vmem>>, vector<1x32xf32>
    %107 = arith.index_cast %c11_i32 : i32 to index
    %c0_45 = arith.constant 0 : index
    %108 = vector.load %arg8[%107, %c0_45] : memref<16x32xf32, #tpu.memory_space<vmem>>, vector<1x32xf32>
    tpu.vector_store %arg8[%107, %c0_45], %106 {strides = array<i32>} : memref<16x32xf32, #tpu.memory_space<vmem>>, vector<1x32xf32>,
    %c12_i32 = arith.constant 12 : i32
    %109 = arith.addi %0, %c12_i32 : i32
    %110 = arith.index_cast %109 : i32 to index
    %111 = memref.load %arg1[%110] : memref<16xi32, #tpu.memory_space<smem>>
    %c0_i32_46 = arith.constant 0 : i32
    %112 = arith.maxsi %111, %c0_i32_46 : i32
    %c127_i32_47 = arith.constant 127 : i32
    %113 = arith.minsi %112, %c127_i32_47 : i32
    %114 = arith.index_cast %113 : i32 to index
    %c0_48 = arith.constant 0 : index
    %115 = vector.load %arg3[%114, %c0_48] : memref<128x32xf32, #tpu.memory_space<vmem>>, vector<1x32xf32>
    %116 = arith.index_cast %c12_i32 : i32 to index
    %c0_49 = arith.constant 0 : index
    %117 = vector.load %arg8[%116, %c0_49] : memref<16x32xf32, #tpu.memory_space<vmem>>, vector<1x32xf32>
    tpu.vector_store %arg8[%116, %c0_49], %115 {strides = array<i32>} : memref<16x32xf32, #tpu.memory_space<vmem>>, vector<1x32xf32>,
    %c13_i32 = arith.constant 13 : i32
    %118 = arith.addi %0, %c13_i32 : i32
    %119 = arith.index_cast %118 : i32 to index
    %120 = memref.load %arg1[%119] : memref<16xi32, #tpu.memory_space<smem>>
    %c0_i32_50 = arith.constant 0 : i32
    %121 = arith.maxsi %120, %c0_i32_50 : i32
    %c127_i32_51 = arith.constant 127 : i32
    %122 = arith.minsi %121, %c127_i32_51 : i32
    %123 = arith.index_cast %122 : i32 to index
    %c0_52 = arith.constant 0 : index
    %124 = vector.load %arg3[%123, %c0_52] : memref<128x32xf32, #tpu.memory_space<vmem>>, vector<1x32xf32>
    %125 = arith.index_cast %c13_i32 : i32 to index
    %c0_53 = arith.constant 0 : index
    %126 = vector.load %arg8[%125, %c0_53] : memref<16x32xf32, #tpu.memory_space<vmem>>, vector<1x32xf32>
    tpu.vector_store %arg8[%125, %c0_53], %124 {strides = array<i32>} : memref<16x32xf32, #tpu.memory_space<vmem>>, vector<1x32xf32>,
    %c14_i32 = arith.constant 14 : i32
    %127 = arith.addi %0, %c14_i32 : i32
    %128 = arith.index_cast %127 : i32 to index
    %129 = memref.load %arg1[%128] : memref<16xi32, #tpu.memory_space<smem>>
    %c0_i32_54 = arith.constant 0 : i32
    %130 = arith.maxsi %129, %c0_i32_54 : i32
    %c127_i32_55 = arith.constant 127 : i32
    %131 = arith.minsi %130, %c127_i32_55 : i32
    %132 = arith.index_cast %131 : i32 to index
    %c0_56 = arith.constant 0 : index
    %133 = vector.load %arg3[%132, %c0_56] : memref<128x32xf32, #tpu.memory_space<vmem>>, vector<1x32xf32>
    %134 = arith.index_cast %c14_i32 : i32 to index
    %c0_57 = arith.constant 0 : index
    %135 = vector.load %arg8[%134, %c0_57] : memref<16x32xf32, #tpu.memory_space<vmem>>, vector<1x32xf32>
    tpu.vector_store %arg8[%134, %c0_57], %133 {strides = array<i32>} : memref<16x32xf32, #tpu.memory_space<vmem>>, vector<1x32xf32>,
    %c15_i32 = arith.constant 15 : i32
    %136 = arith.addi %0, %c15_i32 : i32
    %137 = arith.index_cast %136 : i32 to index
    %138 = memref.load %arg1[%137] : memref<16xi32, #tpu.memory_space<smem>>
    %c0_i32_58 = arith.constant 0 : i32
    %139 = arith.maxsi %138, %c0_i32_58 : i32
    %c127_i32_59 = arith.constant 127 : i32
    %140 = arith.minsi %139, %c127_i32_59 : i32
    %141 = arith.index_cast %140 : i32 to index
    %c0_60 = arith.constant 0 : index
    %142 = vector.load %arg3[%141, %c0_60] : memref<128x32xf32, #tpu.memory_space<vmem>>, vector<1x32xf32>
    %143 = arith.index_cast %c15_i32 : i32 to index
    %c0_61 = arith.constant 0 : index
    %144 = vector.load %arg8[%143, %c0_61] : memref<16x32xf32, #tpu.memory_space<vmem>>, vector<1x32xf32>
    tpu.vector_store %arg8[%143, %c0_61], %142 {strides = array<i32>} : memref<16x32xf32, #tpu.memory_space<vmem>>, vector<1x32xf32>,
    %c16_i32_62 = arith.constant 16 : i32
    %c0_63 = arith.constant 0 : index
    %c0_64 = arith.constant 0 : index
    %145 = vector.load %arg8[%c0_63, %c0_64] : memref<16x32xf32, #tpu.memory_space<vmem>>, vector<16x32xf32>
    %146 = vector.shape_cast %145 : vector<16x32xf32> to vector<2x8x32xf32>
    %147 = arith.truncf %146 : vector<2x8x32xf32> to vector<2x8x32xbf16>
    %c0_65 = arith.constant 0 : index
    %c0_66 = arith.constant 0 : index
    %c0_67 = arith.constant 0 : index
    %148 = vector.load %arg2[%c0_65, %c0_66, %c0_67] : memref<2x128x32xbf16, #tpu.memory_space<vmem>>, vector<2x128x32xbf16>
    "tpu.trace_start"() <{level = 10 : i32, message = "bld,bsd->bls"}> : () -> ()
    %cst = arith.constant dense<0.000000e+00> : vector<2x8x128xf32>
    %149 = tpu.matmul %147, %148, %cst {dimension_numbers = #tpu.dot_dimension_numbers<[2], [2], [1], [1], [0, 0, 0, 1, 1, 1], [0], [0]>} : vector<2x8x32xbf16>, vector<2x128x32xbf16>, vector<2x8x128xf32> -> vector<2x8x128xf32>
    "tpu.trace_stop"() : () -> ()
    %150 = tpu.iota {dimensions = array<i32: 2>} : vector<2x8x128xi32>
    %c8_i32_68 = arith.constant 8 : i32
    %151 = vector.broadcast %c8_i32_68 : i32 to vector<2x8x128xi32>
    %152 = arith.cmpi slt, %150, %151 : vector<2x8x128xi32>
    %cst_69 = arith.constant -1.000000e+30 : f32
    %153 = vector.broadcast %cst_69 : f32 to vector<2x8x128xf32>
    %154 = arith.select %152, %149, %153 : vector<2x8x128xi1>, vector<2x8x128xf32>
    %cst_70 = arith.constant dense<0xFF800000> : vector<2x8xf32>
    %155 = vector.multi_reduction <maximumf>, %154, %cst_70 [2] : vector<2x8x128xf32> to vector<2x8xf32>
    %156 = vector.shape_cast %155 : vector<2x8xf32> to vector<2x8x1xf32>
    %157 = vector.broadcast %156 : vector<2x8x1xf32> to vector<2x8x128xf32>
    %158 = arith.subf %154, %157 : vector<2x8x128xf32>
    %159 = math.exp %158 : vector<2x8x128xf32>
    %cst_71 = arith.constant dense<0.000000e+00> : vector<2x8xf32>
    %160 = vector.multi_reduction <add>, %159, %cst_71 [2] : vector<2x8x128xf32> to vector<2x8xf32>
    %161 = vector.shape_cast %160 : vector<2x8xf32> to vector<2x8x1xf32>
    %162 = tpu.reciprocal %161 {approx = true} : vector<2x8x1xf32> -> vector<2x8x1xf32>
    %163 = vector.broadcast %162 : vector<2x8x1xf32> to vector<2x8x128xf32>
    %164 = arith.mulf %159, %163 : vector<2x8x128xf32>
    %165 = vector.shape_cast %164 : vector<2x8x128xf32> to vector<16x128xf32>
    %c0_72 = arith.constant 0 : index
    %c0_73 = arith.constant 0 : index
    %166 = vector.load %arg7[%c0_72, %c0_73] : memref<16x128xf32, #tpu.memory_space<vmem>>, vector<16x128xf32>
    tpu.vector_store %arg7[%c0_72, %c0_73], %165 {strides = array<i32>} : memref<16x128xf32, #tpu.memory_space<vmem>>, vector<16x128xf32>,
    %167 = arith.truncf %164 : vector<2x8x128xf32> to vector<2x8x128xbf16>
    "tpu.trace_start"() <{level = 10 : i32, message = "bls,bsd->bld"}> : () -> ()
    %cst_74 = arith.constant dense<0.000000e+00> : vector<2x8x32xf32>
    %168 = tpu.matmul %167, %148, %cst_74 {dimension_numbers = #tpu.dot_dimension_numbers<[2], [1], [1], [2], [0, 0, 0, 1, 1, 2], [0], [0]>} : vector<2x8x128xbf16>, vector<2x128x32xbf16>, vector<2x8x32xf32> -> vector<2x8x32xf32>
    "tpu.trace_stop"() : () -> ()
    %c0_75 = arith.constant 0 : index
    %c0_76 = arith.constant 0 : index
    %169 = vector.load %arg5[%c0_75, %c0_76] : memref<1x128xf32, #tpu.memory_space<vmem>>, vector<1x128xf32>
    %170 = vector.shape_cast %168 : vector<2x8x32xf32> to vector<16x32xf32>
    %171 = arith.truncf %170 : vector<16x32xf32> to vector<16x32xbf16>
    %c0_77 = arith.constant 0 : index
    %c0_78 = arith.constant 0 : index
    %172 = vector.load %arg4[%c0_77, %c0_78] : memref<32x128xbf16, #tpu.memory_space<vmem>>, vector<32x128xbf16>
    %cst_79 = arith.constant dense<0.000000e+00> : vector<16x128xf32>
    %173 = tpu.matmul %171, %172, %cst_79 {dimension_numbers = #tpu.dot_dimension_numbers<[1], [0], [0], [1], [0, 0, 1, 1], [], []>} : vector<16x32xbf16>, vector<32x128xbf16>, vector<16x128xf32> -> vector<16x128xf32>
    %174 = vector.broadcast %169 : vector<1x128xf32> to vector<16x128xf32>
    %175 = arith.addf %173, %174 : vector<16x128xf32>
    %cst_80 = arith.constant dense<0xFF800000> : vector<16xf32>
    %176 = vector.multi_reduction <maximumf>, %175, %cst_80 [1] : vector<16x128xf32> to vector<16xf32>
    %177 = vector.shape_cast %176 : vector<16xf32> to vector<16x1xf32>
    %178 = vector.broadcast %177 : vector<16x1xf32> to vector<16x128xf32>
    %179 = arith.subf %175, %178 : vector<16x128xf32>
    %180 = math.exp %179 : vector<16x128xf32>
    %cst_81 = arith.constant dense<0.000000e+00> : vector<16xf32>
    %181 = vector.multi_reduction <add>, %180, %cst_81 [1] : vector<16x128xf32> to vector<16xf32>
    %182 = vector.shape_cast %181 : vector<16xf32> to vector<16x1xf32>
    %183 = math.log %182 : vector<16x1xf32>
    %184 = vector.broadcast %183 : vector<16x1xf32> to vector<16x128xf32>
    %185 = arith.subf %179, %184 : vector<16x128xf32>
    %c0_82 = arith.constant 0 : index
    %c0_83 = arith.constant 0 : index
    %186 = vector.load %arg6[%c0_82, %c0_83] : memref<16x128xf32, #tpu.memory_space<vmem>>, vector<16x128xf32>
    tpu.vector_store %arg6[%c0_82, %c0_83], %185 {strides = array<i32>} : memref<16x128xf32, #tpu.memory_space<vmem>>, vector<16x128xf32>,
    return
  }
  func.func @transform_0(%arg0: i32, %arg1: memref<16xi32, #tpu.memory_space<smem>>) -> (i32, i32, i32) {
    %c0_i32 = arith.constant 0 : i32
    %c0_i32_0 = arith.constant 0 : i32
    %c0_i32_1 = arith.constant 0 : i32
    return %arg0, %c0_i32, %c0_i32_0 : i32, i32, i32
  }
  func.func @transform_1(%arg0: i32, %arg1: memref<16xi32, #tpu.memory_space<smem>>) -> (i32, i32) {
    %c0_i32 = arith.constant 0 : i32
    %c0_i32_0 = arith.constant 0 : i32
    %c0_i32_1 = arith.constant 0 : i32
    return %c0_i32, %c0_i32_0 : i32, i32
  }
  func.func @transform_2(%arg0: i32, %arg1: memref<16xi32, #tpu.memory_space<smem>>) -> (i32, i32) {
    %c0_i32 = arith.constant 0 : i32
    %c0_i32_0 = arith.constant 0 : i32
    %c0_i32_1 = arith.constant 0 : i32
    return %c0_i32, %c0_i32_0 : i32, i32
  }
  func.func @transform_3(%arg0: i32, %arg1: memref<16xi32, #tpu.memory_space<smem>>) -> (i32, i32) {
    %c0_i32 = arith.constant 0 : i32
    %c0_i32_0 = arith.constant 0 : i32
    %c0_i32_1 = arith.constant 0 : i32
    return %c0_i32, %c0_i32_0 : i32, i32
  }
  func.func @transform_4(%arg0: i32, %arg1: memref<16xi32, #tpu.memory_space<smem>>) -> (i32, i32) {
    %c0_i32 = arith.constant 0 : i32
    %c0_i32_0 = arith.constant 0 : i32
    return %arg0, %c0_i32 : i32, i32
  }
  func.func @transform_5(%arg0: i32, %arg1: memref<16xi32, #tpu.memory_space<smem>>) -> (i32, i32) {
    %c0_i32 = arith.constant 0 : i32
    %c0_i32_0 = arith.constant 0 : i32
    return %arg0, %c0_i32 : i32, i32
  }
}

</mosaic_0001>

<llo_original>
// kernel: _decoder_device_forward.1
$region0: #{_decoder_device_forward.1}
  #allocation0 [shape = 'u32[]', space=smem, size = 0x4, offset = 0x4, fixed_abs, tag = 'smem constant byte address 0x4 - core index']
  #allocation1 [shape = 'u32[72,128]{1,0:T(1,128)}', space=vmem, size = 0x9000, scoped, tag = 'internal scratch']
  #allocation2 [shape = 'f32[16,32]{1,0:T(8,128)}', space=vmem, size = 0x2000, scoped, tag = 'scratch operand']
  #allocation3 [shape = 's32[1]{0}', space=sflag, size = 0x4, scoped, tag = 'scoped memory for _decoder_device_forward.1']
  #allocation4 [shape = 'u8[512]{0}', space=smem, size = 0x200, scoped, tag = 'prefetched SMEM operand 0']
  %s0 = inlined_call_operand.vmem [shape: s32[16], index: 0, kind: input, shape index: {}]
  %s1 = inlined_call_operand.vmem [shape: bf16[2,128,32], index: 1, kind: input, shape index: {}]
  %s2 = inlined_call_operand.vmem [shape: f32[128,32], index: 2, kind: input, shape index: {}]
  %s3 = inlined_call_operand.vmem [shape: bf16[32,128], index: 3, kind: input, shape index: {}]
  %s4 = inlined_call_operand.vmem [shape: f32[1,128], index: 4, kind: input, shape index: {}]
  %s5 = inlined_call_operand.vmem [shape: f32[16,128], index: 5, kind: output, shape index: {0}]
  %s6 = inlined_call_operand.hbm [shape: f32[16,128], index: 6, kind: output, shape index: {1}]
  %7 = xla_tuple %s5, %s6
  %s8 = sld [smem:[#allocation0]]
  $region34: #{_decoder_device_forward.1} parent=0
    _
  %s10 = ssub.s32 1, %s8
  %s11 = scalar_select 0, %s10, %s8
  %s13 = sshll.u32 %s0, 4
  %s14 = int_to_ptr.vmem [resolvable:$true] %s13
  %16 = dma.vmem_to_smem %s14, 16, [#allocation4], [#allocation3]
  %18 = dma.done [#allocation3], 16
  %19 = sfence
  $region1: #{_decoder_device_forward.1} parent=0
    #allocation5 [shape = 'u8[8192]{0}', space=vmem, size = 0x2000, scoped, tag = 'output window, operand 1, single buffered']
    #allocation6 [shape = 's32[1]{0}', space=sflag, size = 0x4, scoped, tag = 'scoped memory for _decoder_device_forward.1']
    %20 = vsyncpa [#allocation6], 0
    // Predicated region
    $region2: #{_decoder_device_forward.1} parent=1 // pred_check
      _
    $region3: #{_decoder_device_forward.1} parent=1 // pred_check_branch
      %22 = sbr.rel (0) target = $region5
    $region4: #{_decoder_device_forward.1} parent=1 // pred_region
      _
    $region5: #{_decoder_device_forward.1} parent=1 // pred_fallthru
      _
    // Predicated region
    $region6: #{_decoder_device_forward.1} parent=1 // pred_check
      _
    $region7: #{_decoder_device_forward.1} parent=1 // pred_check_branch
      %24 = sbr.rel (0) target = $region9
    $region8: #{_decoder_device_forward.1} parent=1 // pred_region
      _
    $region9: #{_decoder_device_forward.1} parent=1 // pred_fallthru
      _
    // Predicated region
    $region10: #{_decoder_device_forward.1} parent=1 // pred_check
      _
    $region11: #{_decoder_device_forward.1} parent=1 // pred_check_branch
      %26 = sbr.rel (0) target = $region13
    $region12: #{_decoder_device_forward.1} parent=1 // pred_region
      _
    $region13: #{_decoder_device_forward.1} parent=1 // pred_fallthru
      _
    // Predicated region
    $region14: #{_decoder_device_forward.1} parent=1 // pred_check
      _
    $region15: #{_decoder_device_forward.1} parent=1 // pred_check_branch
      %28 = sbr.rel (0) target = $region17
    $region16: #{_decoder_device_forward.1} parent=1 // pred_region
      _
    $region17: #{_decoder_device_forward.1} parent=1 // pred_fallthru
      _
    %s30 = smul.u32 0, 16
    %s31 = sld [smem:[#allocation4 + %s30]]
    %p32 = scmp.gt.s32.totalorder %s31, 0
    %s33 = scalar_select %p32, %s31, 0
    %p34 = scmp.lt.s32.totalorder %s33, 127
    %s35 = scalar_select %p34, %s33, 127
    %s36 = scalar_lea.vmem %s2, %s35
    %v37 = vld [vmem:[%s36] sm:$0x1]
    %vm38 = vcmask 253952
    %39 = vst.msk [vmem:[#allocation2] sm:$0x1] %vm38, %v37
    %s40 = sadd.s32 %s30, 1
    %s41 = sld [smem:[#allocation4 + %s40]]
    %p42 = scmp.gt.s32.totalorder %s41, 0
    %s43 = scalar_select %p42, %s41, 0
    %p44 = scmp.lt.s32.totalorder %s43, 127
    %s45 = scalar_select %p44, %s43, 127
    %s46 = scalar_lea.vmem %s2, %s45
    %v47 = vld [vmem:[%s46] sm:$0x1]
    %48 = vst.msk [vmem:[#allocation2 + $0x1] sm:$0x1] %vm38, %v47
    %s49 = sadd.s32 %s30, 2
    %s50 = sld [smem:[#allocation4 + %s49]]
    %p51 = scmp.gt.s32.totalorder %s50, 0
    %s52 = scalar_select %p51, %s50, 0
    %p53 = scmp.lt.s32.totalorder %s52, 127
    %s54 = scalar_select %p53, %s52, 127
    %s55 = scalar_lea.vmem %s2, %s54
    %v56 = vld [vmem:[%s55] sm:$0x1]
    %57 = vst.msk [vmem:[#allocation2 + $0x2] sm:$0x1] %vm38, %v56
    %s58 = sadd.s32 %s30, 3
    %s59 = sld [smem:[#allocation4 + %s58]]
    %p60 = scmp.gt.s32.totalorder %s59, 0
    %s61 = scalar_select %p60, %s59, 0
    %p62 = scmp.lt.s32.totalorder %s61, 127
    %s63 = scalar_select %p62, %s61, 127
    %s64 = scalar_lea.vmem %s2, %s63
    %v65 = vld [vmem:[%s64] sm:$0x1]
    %66 = vst.msk [vmem:[#allocation2 + $0x3] sm:$0x1] %vm38, %v65
    %s67 = sadd.s32 %s30, 4
    %s68 = sld [smem:[#allocation4 + %s67]]
    %p69 = scmp.gt.s32.totalorder %s68, 0
    %s70 = scalar_select %p69, %s68, 0
    %p71 = scmp.lt.s32.totalorder %s70, 127
    %s72 = scalar_select %p71, %s70, 127
    %s73 = scalar_lea.vmem %s2, %s72
    %v74 = vld [vmem:[%s73] sm:$0x1]
    %75 = vst.msk [vmem:[#allocation2 + $0x4] sm:$0x1] %vm38, %v74
    %s76 = sadd.s32 %s30, 5
    %s77 = sld [smem:[#allocation4 + %s76]]
    %p78 = scmp.gt.s32.totalorder %s77, 0
    %s79 = scalar_select %p78, %s77, 0
    %p80 = scmp.lt.s32.totalorder %s79, 127
    %s81 = scalar_select %p80, %s79, 127
    %s82 = scalar_lea.vmem %s2, %s81
    %v83 = vld [vmem:[%s82] sm:$0x1]
    %84 = vst.msk [vmem:[#allocation2 + $0x5] sm:$0x1] %vm38, %v83
    %s85 = sadd.s32 %s30, 6
    %s86 = sld [smem:[#allocation4 + %s85]]
    %p87 = scmp.gt.s32.totalorder %s86, 0
    %s88 = scalar_select %p87, %s86, 0
    %p89 = scmp.lt.s32.totalorder %s88, 127
    %s90 = scalar_select %p89, %s88, 127
    %s91 = scalar_lea.vmem %s2, %s90
    %v92 = vld [vmem:[%s91] sm:$0x1]
    %93 = vst.msk [vmem:[#allocation2 + $0x6] sm:$0x1] %vm38, %v92
    %s94 = sadd.s32 %s30, 7
    %s95 = sld [smem:[#allocation4 + %s94]]
    %p96 = scmp.gt.s32.totalorder %s95, 0
    %s97 = scalar_select %p96, %s95, 0
    %p98 = scmp.lt.s32.totalorder %s97, 127
    %s99 = scalar_select %p98, %s97, 127
    %s100 = scalar_lea.vmem %s2, %s99
    %v101 = vld [vmem:[%s100] sm:$0x1]
    %102 = vst.msk [vmem:[#allocation2 + $0x7] sm:$0x1] %vm38, %v101
    %s103 = sadd.s32 %s30, 8
    %s104 = sld [smem:[#allocation4 + %s103]]
    %p105 = scmp.gt.s32.totalorder %s104, 0
    %s106 = scalar_select %p105, %s104, 0
    %p107 = scmp.lt.s32.totalorder %s106, 127
    %s108 = scalar_select %p107, %s106, 127
    %s109 = scalar_lea.vmem %s2, %s108
    %v110 = vld [vmem:[%s109] sm:$0x1]
    %111 = vst.msk [vmem:[#allocation2 + $0x8] sm:$0x1] %vm38, %v110
    %s112 = sadd.s32 %s30, 9
    %s113 = sld [smem:[#allocation4 + %s112]]
    %p114 = scmp.gt.s32.totalorder %s113, 0
    %s115 = scalar_select %p114, %s113, 0
    %p116 = scmp.lt.s32.totalorder %s115, 127
    %s117 = scalar_select %p116, %s115, 127
    %s118 = scalar_lea.vmem %s2, %s117
    %v119 = vld [vmem:[%s118] sm:$0x1]
    %120 = vst.msk [vmem:[#allocation2 + $0x9] sm:$0x1] %vm38, %v119
    %s121 = sadd.s32 %s30, 10
    %s122 = sld [smem:[#allocation4 + %s121]]
    %p123 = scmp.gt.s32.totalorder %s122, 0
    %s124 = scalar_select %p123, %s122, 0
    %p125 = scmp.lt.s32.totalorder %s124, 127
    %s126 = scalar_select %p125, %s124, 127
    %s127 = scalar_lea.vmem %s2, %s126
    %v128 = vld [vmem:[%s127] sm:$0x1]
    %129 = vst.msk [vmem:[#allocation2 + $0xa] sm:$0x1] %vm38, %v128
    %s130 = sadd.s32 %s30, 11
    %s131 = sld [smem:[#allocation4 + %s130]]
    %p132 = scmp.gt.s32.totalorder %s131, 0
    %s133 = scalar_select %p132, %s131, 0
    %p134 = scmp.lt.s32.totalorder %s133, 127
    %s135 = scalar_select %p134, %s133, 127
    %s136 = scalar_lea.vmem %s2, %s135
    %v137 = vld [vmem:[%s136] sm:$0x1]
    %138 = vst.msk [vmem:[#allocation2 + $0xb] sm:$0x1] %vm38, %v137
    %s139 = sadd.s32 %s30, 12
    %s140 = sld [smem:[#allocation4 + %s139]]
    %p141 = scmp.gt.s32.totalorder %s140, 0
    %s142 = scalar_select %p141, %s140, 0
    %p143 = scmp.lt.s32.totalorder %s142, 127
    %s144 = scalar_select %p143, %s142, 127
    %s145 = scalar_lea.vmem %s2, %s144
    %v146 = vld [vmem:[%s145] sm:$0x1]
    %147 = vst.msk [vmem:[#allocation2 + $0xc] sm:$0x1] %vm38, %v146
    %s148 = sadd.s32 %s30, 13
    %s149 = sld [smem:[#allocation4 + %s148]]
    %p150 = scmp.gt.s32.totalorder %s149, 0
    %s151 = scalar_select %p150, %s149, 0
    %p152 = scmp.lt.s32.totalorder %s151, 127
    %s153 = scalar_select %p152, %s151, 127
    %s154 = scalar_lea.vmem %s2, %s153
    %v155 = vld [vmem:[%s154] sm:$0x1]
    %156 = vst.msk [vmem:[#allocation2 + $0xd] sm:$0x1] %vm38, %v155
    %s157 = sadd.s32 %s30, 14
    %s158 = sld [smem:[#allocation4 + %s157]]
    %p159 = scmp.gt.s32.totalorder %s158, 0
    %s160 = scalar_select %p159, %s158, 0
    %p161 = scmp.lt.s32.totalorder %s160, 127
    %s162 = scalar_select %p161, %s160, 127
    %s163 = scalar_lea.vmem %s2, %s162
    %v164 = vld [vmem:[%s163] sm:$0x1]
    %165 = vst.msk [vmem:[#allocation2 + $0xe] sm:$0x1] %vm38, %v164
    %s166 = sadd.s32 %s30, 15
    %s167 = sld [smem:[#allocation4 + %s166]]
    %p168 = scmp.gt.s32.totalorder %s167, 0
    %s169 = scalar_select %p168, %s167, 0
    %p170 = scmp.lt.s32.totalorder %s169, 127
    %s171 = scalar_select %p170, %s169, 127
    %s172 = scalar_lea.vmem %s2, %s171
    %v173 = vld [vmem:[%s172] sm:$0x1]
    %174 = vst.msk [vmem:[#allocation2 + $0xf] sm:$0x1] %vm38, %v173
    %v175 = vld [vmem:[#allocation2] sm:$0xff]
    %v176 = vld [vmem:[#allocation2 + $0x8] sm:$0xff]
    %v177 = vpack.c.bf16 %v175, %v175
    %v178 = vpack.c.bf16 %v176, %v176
    %v179 = vld [vmem:[%s1] sm:$0xf]
    %v180 = vld [vmem:[%s1 + $0x4] sm:$0xf]
    %v181 = vld [vmem:[%s1 + $0x8] sm:$0xf]
    %v182 = vld [vmem:[%s1 + $0xc] sm:$0xf]
    %v183 = vld [vmem:[%s1 + $0x10] sm:$0xf]
    %v184 = vld [vmem:[%s1 + $0x14] sm:$0xf]
    %v185 = vld [vmem:[%s1 + $0x18] sm:$0xf]
    %v186 = vld [vmem:[%s1 + $0x1c] sm:$0xf]
    %v187 = vld [vmem:[%s1 + $0x20] sm:$0xf]
    %v188 = vld [vmem:[%s1 + $0x24] sm:$0xf]
    %v189 = vld [vmem:[%s1 + $0x28] sm:$0xf]
    %v190 = vld [vmem:[%s1 + $0x2c] sm:$0xf]
    %v191 = vld [vmem:[%s1 + $0x30] sm:$0xf]
    %v192 = vld [vmem:[%s1 + $0x34] sm:$0xf]
    %v193 = vld [vmem:[%s1 + $0x38] sm:$0xf]
    %v194 = vld [vmem:[%s1 + $0x3c] sm:$0xf]
    %v195 = vld [vmem:[%s1 + $0x40] sm:$0xf]
    %v196 = vld [vmem:[%s1 + $0x44] sm:$0xf]
    %v197 = vld [vmem:[%s1 + $0x48] sm:$0xf]
    %v198 = vld [vmem:[%s1 + $0x4c] sm:$0xf]
    %v199 = vld [vmem:[%s1 + $0x50] sm:$0xf]
    %v200 = vld [vmem:[%s1 + $0x54] sm:$0xf]
    %v201 = vld [vmem:[%s1 + $0x58] sm:$0xf]
    %v202 = vld [vmem:[%s1 + $0x5c] sm:$0xf]
    %v203 = vld [vmem:[%s1 + $0x60] sm:$0xf]
    %v204 = vld [vmem:[%s1 + $0x64] sm:$0xf]
    %v205 = vld [vmem:[%s1 + $0x68] sm:$0xf]
    %v206 = vld [vmem:[%s1 + $0x6c] sm:$0xf]
    %v207 = vld [vmem:[%s1 + $0x70] sm:$0xf]
    %v208 = vld [vmem:[%s1 + $0x74] sm:$0xf]
    %v209 = vld [vmem:[%s1 + $0x78] sm:$0xf]
    %v210 = vld [vmem:[%s1 + $0x7c] sm:$0xf]
    %v227 = vunpack.c.l.b16 %v179
    %v228 = vunpack.c.l.b16 %v180
    %v229 = vunpack.c.l.b16 %v181
    %v230 = vunpack.c.l.b16 %v182
    %v231 = vunpack.c.l.b16 %v183
    %v232 = vunpack.c.l.b16 %v184
    %v233 = vunpack.c.l.b16 %v185
    %v234 = vunpack.c.l.b16 %v186
    %v235 = vunpack.c.l.b16 %v187
    %v236 = vunpack.c.l.b16 %v188
    %v237 = vunpack.c.l.b16 %v189
    %v238 = vunpack.c.l.b16 %v190
    %v239 = vunpack.c.l.b16 %v191
    %v240 = vunpack.c.l.b16 %v192
    %v241 = vunpack.c.l.b16 %v193
    %v242 = vunpack.c.l.b16 %v194
    %v243 = vpack.c.b16 %v228, %v227
    %v244 = vpack.c.b16 %v230, %v229
    %v245 = vpack.c.b16 %v232, %v231
    %v246 = vpack.c.b16 %v234, %v233
    %v247 = vpack.c.b16 %v236, %v235
    %v248 = vpack.c.b16 %v238, %v237
    %v249 = vpack.c.b16 %v240, %v239
    %v250 = vpack.c.b16 %v242, %v241
    %vm251 = vcmask 261120
    %v253 = vsel %vm251, %v177, 0
    %v256 = vsel %vm251, %v243, 0
    %v259 = vsel %vm251, %v244, 0
    %v262 = vsel %vm251, %v245, 0
    %v265 = vsel %vm251, %v246, 0
    %v268 = vsel %vm251, %v247, 0
    %v271 = vsel %vm251, %v248, 0
    %v274 = vsel %vm251, %v249, 0
    %v277 = vsel %vm251, %v250, 0
    %279 = vmatpush.bf16.xpose.msra.mxu0 %v277
    %280 = vmatpush.bf16.xpose.msra.mxu0 %v274
    %281 = vmatpush.bf16.xpose.msra.mxu0 %v271
    %282 = vmatpush.bf16.xpose.msra.mxu0 %v268
    %283 = vmatpush.bf16.xpose.msra.mxu0 %v265
    %284 = vmatpush.bf16.xpose.msra.mxu0 %v262
    %285 = vmatpush.bf16.xpose.msra.mxu0 %v259
    %286 = vmatpush.bf16.xpose.msra.mxu0 %v256
    %287 = vmatmul.bf16.gmra.mxu0 %v253
    %v288 = vpop.f32.mrf.mxu0
    %v289 = vadd.f32 0.0, %v288
    %v290 = vpop.f32.mrf.mxu0
    %291 = vdwg.mxu0
    %v308 = vunpack.c.l.b16 %v195
    %v309 = vunpack.c.l.b16 %v196
    %v310 = vunpack.c.l.b16 %v197
    %v311 = vunpack.c.l.b16 %v198
    %v312 = vunpack.c.l.b16 %v199
    %v313 = vunpack.c.l.b16 %v200
    %v314 = vunpack.c.l.b16 %v201
    %v315 = vunpack.c.l.b16 %v202
    %v316 = vunpack.c.l.b16 %v203
    %v317 = vunpack.c.l.b16 %v204
    %v318 = vunpack.c.l.b16 %v205
    %v319 = vunpack.c.l.b16 %v206
    %v320 = vunpack.c.l.b16 %v207
    %v321 = vunpack.c.l.b16 %v208
    %v322 = vunpack.c.l.b16 %v209
    %v323 = vunpack.c.l.b16 %v210
    %v324 = vpack.c.b16 %v309, %v308
    %v325 = vpack.c.b16 %v311, %v310
    %v326 = vpack.c.b16 %v313, %v312
    %v327 = vpack.c.b16 %v315, %v314
    %v328 = vpack.c.b16 %v317, %v316
    %v329 = vpack.c.b16 %v319, %v318
    %v330 = vpack.c.b16 %v321, %v320
    %v331 = vpack.c.b16 %v323, %v322
    %v333 = vsel %vm251, %v178, 0
    %v336 = vsel %vm251, %v324, 0
    %v339 = vsel %vm251, %v325, 0
    %v342 = vsel %vm251, %v326, 0
    %v345 = vsel %vm251, %v327, 0
    %v348 = vsel %vm251, %v328, 0
    %v351 = vsel %vm251, %v329, 0
    %v354 = vsel %vm251, %v330, 0
    %v357 = vsel %vm251, %v331, 0
    %359 = vmatpush.bf16.xpose.msra.mxu0 %v357
    %360 = vmatpush.bf16.xpose.msra.mxu0 %v354
    %361 = vmatpush.bf16.xpose.msra.mxu0 %v351
    %362 = vmatpush.bf16.xpose.msra.mxu0 %v348
    %363 = vmatpush.bf16.xpose.msra.mxu0 %v345
    %364 = vmatpush.bf16.xpose.msra.mxu0 %v342
    %365 = vmatpush.bf16.xpose.msra.mxu0 %v339
    %366 = vmatpush.bf16.xpose.msra.mxu0 %v336
    %367 = vmatmul.bf16.gmra.mxu0 %v333
    %v368 = vpop.f32.mrf.mxu0
    %v369 = vadd.f32 0.0, %v368
    %v370 = vpop.f32.mrf.mxu0
    %371 = vdwg.mxu0
    %v372 = vlaneseq
    %v373 = vand.u32 %v372, 127
    %vm374 = vcmp.lt.s32.totalorder %v373, 8
    %v375 = vsel %vm374, %v289, -1e+30
    %v376 = vsel %vm374, %v369, -1e+30
    %377 = vmax.xlane.f32.xlu0 %v375
    %v378 = vpop.xlane.xlu0 %377
    %379 = vmax.xlane.f32.xlu0 %v376
    %v380 = vpop.xlane.xlu0 %379
    %v381 = vsub.f32 %v375, %v378
    %v382 = vsub.f32 %v376, %v380
    %v383 = vmul.f32 %v381, 1.442695
    %v384 = vpow.pop %v383
    %v385 = vmul.f32 %v382, 1.442695
    %v386 = vpow.pop %v385
    %387 = vadd.xlane.f32.xlu0 %v384
    %v388 = vpop.xlane.xlu0 %387
    %389 = vadd.xlane.f32.xlu0 %v386
    %v390 = vpop.xlane.xlu0 %389
    %v391 = vrcp.pop %v388
    %v392 = vrcp.pop %v390
    %v393 = vmul.f32 %v384, %v391
    %v394 = vmul.f32 %v386, %v392
    %395 = vst [vmem:[#allocation5] sm:$0xff] %v393
    %396 = vst [vmem:[#allocation5 + $0x8] sm:$0xff] %v394
    %v397 = vpack.c.bf16 %v393, %v393
    %v398 = vpack.c.bf16 %v394, %v394
    %407 = vmatpush.bf16.msra.mxu0 %v250
    %408 = vmatpush.bf16.msra.mxu0 %v249
    %409 = vmatpush.bf16.msra.mxu0 %v248
    %410 = vmatpush.bf16.msra.mxu0 %v247
    %411 = vmatpush.bf16.msra.mxu0 %v246
    %412 = vmatpush.bf16.msra.mxu0 %v245
    %413 = vmatpush.bf16.msra.mxu0 %v244
    %414 = vmatpush.bf16.msra.mxu0 %v243
    %415 = vmatmul.bf16.gmra.mxu0 %v397
    %v416 = vpop.f32.mrf.mxu0
    %v417 = vadd.f32 0.0, %v416
    %v418 = vpop.f32.mrf.mxu0
    %419 = vdwg.mxu0
    %428 = vmatpush.bf16.msra.mxu0 %v331
    %429 = vmatpush.bf16.msra.mxu0 %v330
    %430 = vmatpush.bf16.msra.mxu0 %v329
    %431 = vmatpush.bf16.msra.mxu0 %v328
    %432 = vmatpush.bf16.msra.mxu0 %v327
    %433 = vmatpush.bf16.msra.mxu0 %v326
    %434 = vmatpush.bf16.msra.mxu0 %v325
    %435 = vmatpush.bf16.msra.mxu0 %v324
    %436 = vmatmul.bf16.gmra.mxu0 %v398
    %v437 = vpop.f32.mrf.mxu0
    %v438 = vadd.f32 0.0, %v437
    %v439 = vpop.f32.mrf.mxu0
    %440 = vdwg.mxu0
    %v441 = vld [vmem:[%s4] sm:$0x1]
    %v442 = vpack.c.bf16 %v438, %v417
    %v443 = vld [vmem:[%s3] sm:$0xf]
    %v444 = vld [vmem:[%s3 + $0x4] sm:$0xf]
    %v445 = vld [vmem:[%s3 + $0x8] sm:$0xf]
    %v446 = vld [vmem:[%s3 + $0xc] sm:$0xf]
    %v448 = vperm.slane %v441, 0
    %v454 = vunpack.c.l.b16 %v443
    %v455 = vunpack.c.l.b16 %v444
    %v456 = vunpack.c.l.b16 %v445
    %v457 = vunpack.c.l.b16 %v446
    %v458 = vpack.c.b16 %v455, %v454
    %v459 = vpack.c.b16 %v457, %v456
    %v463 = vsel %vm251, %v442, 0
    %465 = vmatpush.bf16.msra.mxu0 0
    %466 = vmatpush.bf16.msra.mxu0 0
    %467 = vmatpush.bf16.msra.mxu0 0
    %468 = vmatpush.bf16.msra.mxu0 0
    %469 = vmatpush.bf16.msra.mxu0 0
    %470 = vmatpush.bf16.msra.mxu0 0
    %471 = vmatpush.bf16.msra.mxu0 %v459
    %472 = vmatpush.bf16.msra.mxu0 %v458
    %473 = vmatmul.bf16.gmra.mxu0 %v463
    %v474 = vpop.f32.mrf.mxu0
    %v475 = vadd.f32 %v448, %v474
    %v476 = vpop.f32.mrf.mxu0
    %v477 = vadd.f32 %v448, %v476
    %478 = vdwg.mxu0
    %479 = vmax.xlane.f32.xlu0 %v475
    %v480 = vpop.xlane.xlu0 %479
    %481 = vmax.xlane.f32.xlu0 %v477
    %v482 = vpop.xlane.xlu0 %481
    %v483 = vsub.f32 %v475, %v480
    %v484 = vsub.f32 %v477, %v482
    %v485 = vmul.f32 %v483, 1.442695
    %v486 = vpow.pop %v485
    %v487 = vmul.f32 %v484, 1.442695
    %v488 = vpow.pop %v487
    %489 = vadd.xlane.f32.xlu0 %v486
    %v490 = vpop.xlane.xlu0 %489
    %491 = vadd.xlane.f32.xlu0 %v488
    %v492 = vpop.xlane.xlu0 %491
    %v493 = vlog2.pop %v490
    %v494 = vmul.f32 %v493, 0.6931472
    %v495 = vlog2.pop %v492
    %v496 = vmul.f32 %v495, 0.6931472
    %v497 = vsub.f32 %v483, %v494
    %v498 = vsub.f32 %v484, %v496
    %499 = vst [vmem:[%s5] sm:$0xff] %v497
    %500 = vst [vmem:[%s5 + $0x8] sm:$0xff] %v498
    // Predicated region
    $region18: #{_decoder_device_forward.1} parent=1 // pred_check
      _
    $region19: #{_decoder_device_forward.1} parent=1 // pred_check_branch
      %502 = sbr.rel (0) target = $region21
    $region20: #{_decoder_device_forward.1} parent=1 // pred_region
      _
    $region21: #{_decoder_device_forward.1} parent=1 // pred_fallthru
      _
    // Predicated region
    $region22: #{_decoder_device_forward.1} parent=1 // pred_check
      _
    $region23: #{_decoder_device_forward.1} parent=1 // pred_check_branch
      %504 = sbr.rel (0) target = $region25
    $region24: #{_decoder_device_forward.1} parent=1 // pred_region
      %506 = vsyncadd [#allocation6], 0
      %s507 = sshll.u32 [#allocation5], 4
      %s508 = int_to_ptr.vmem [resolvable:$true] %s507
      %s509 = sshll.u32 %s6, 4
      %s510 = int_to_ptr.hbm [resolvable:$true] %s509
      %515 = dma.vmem_to_hbm [thread:$0]  %s508, 256, %s510, [#allocation6], 128, 128, 8
    $region25: #{_decoder_device_forward.1} parent=1 // pred_fallthru
      _
    // Predicated region
    $region26: #{_decoder_device_forward.1} parent=1 // pred_check
      _
    $region27: #{_decoder_device_forward.1} parent=1 // pred_check_branch
      %517 = sbr.rel (0) target = $region29
    $region28: #{_decoder_device_forward.1} parent=1 // pred_region
      _
    $region29: #{_decoder_device_forward.1} parent=1 // pred_fallthru
      _
    // Predicated region
    $region30: #{_decoder_device_forward.1} parent=1 // pred_check
      _
    $region31: #{_decoder_device_forward.1} parent=1 // pred_check_branch
      %519 = sbr.rel (0) target = $region33
    $region32: #{_decoder_device_forward.1} parent=1 // pred_region
      %521 = dma.done [#allocation6], 256
    $region33: #{_decoder_device_forward.1} parent=1 // pred_fallthru
      _
    %522 = vsyncpa [#allocation6], 1

</llo_original>
